<compile_context>
chip_gen: v5e
topology: v5e:2x2
jax: 0.10.0
libtpu: 0.0.40
codegen_flags: <defaults>
</compile_context>

<pallas_src>
import functools
import math

import jax
import jax.numpy as jnp
from jax.experimental import pallas as pl
from jax.experimental.pallas import tpu as pltpu


# Safe on every generation: below v7x's 64 MiB physical VMEM, and below the
# 128 MiB on v5e/v6e, while well above the 16/32 MiB scoped defaults.
_VMEM_LIMIT_BYTES = 48 * 1024 * 1024


def _round_up(x, m):
    return ((x + m - 1) // m) * m


def _pick_tile(extent, candidates):
    """Largest candidate that divides `extent` (extent is already aligned)."""
    for c in candidates:
        if c <= extent and extent % c == 0:
            return c
    return extent


# --------------------------------------------------------------------------
# One-time parameter preparation (hoisted out of the forward pass)
# --------------------------------------------------------------------------
def prepare_params(params):
    """Relayout each (weight (N,K), bias (N,)) into:
         wp: (Kp, Np) f32, lane-dense output dim last, zero padded
         bp: (1, Np)  f32, zero padded
    with Kp = round_up(K, 128), Np = round_up(N, 128).  Zero padding keeps the
    chained matmuls exact (padded K rows / N cols contribute nothing)."""
    prepared = []
    for w, b in params:
        N, K = w.shape
        Kp = _round_up(K, 128)
        Np = _round_up(N, 128)
        wp = jnp.zeros((Kp, Np), jnp.float32).at[:K, :N].set(
            w.T.astype(jnp.float32))
        bp = jnp.zeros((1, Np), jnp.float32).at[0, :N].set(
            b.astype(jnp.float32))
        prepared.append((wp, bp))
    return prepared


# --------------------------------------------------------------------------
# Fused whole-MLP kernel (weights VMEM-resident, activations never hit HBM)
# --------------------------------------------------------------------------
def _fused_mlp_kernel(*refs, n_layers):
    x_ref = refs[0]
    o_ref = refs[-1]
    h = x_ref[...].astype(jnp.float32)
    for l in range(n_layers):
        w = refs[1 + 2 * l][...]
        b = refs[2 + 2 * l][...]
        h = jnp.dot(h, w, preferred_element_type=jnp.float32) + b
        if l < n_layers - 1:
            h = jnp.maximum(h, 0.0)
    o_ref[...] = h.astype(o_ref.dtype)


def _mlp_fused(xp, prepared):
    Mp, K0p = xp.shape
    n_layers = len(prepared)
    Np_last = prepared[-1][0].shape[1]

    tm = _pick_tile(Mp, (256, 128, 64, 32, 16, 8))
    grid = (Mp // tm,)

    in_specs = [pl.BlockSpec((tm, K0p), lambda i: (i, 0))]
    for wp, bp in prepared:
        kp, np_ = wp.shape
        in_specs.append(pl.BlockSpec((kp, np_), lambda i: (0, 0)))
        in_specs.append(pl.BlockSpec((1, np_), lambda i: (0, 0)))

    flat_params = [a for wb in prepared for a in wb]

    return pl.pallas_call(
        functools.partial(_fused_mlp_kernel, n_layers=n_layers),
        out_shape=jax.ShapeDtypeStruct((Mp, Np_last), jnp.float32),
        grid_spec=pltpu.PrefetchScalarGridSpec(
            num_scalar_prefetch=0,
            grid=grid,
            in_specs=in_specs,
            out_specs=pl.BlockSpec((tm, Np_last), lambda i: (i, 0)),
        ),
        compiler_params=pltpu.CompilerParams(
            dimension_semantics=("parallel",),
            vmem_limit_bytes=_VMEM_LIMIT_BYTES,
        ),
    )(xp, *flat_params)


# --------------------------------------------------------------------------
# Fallback: per-layer tiled matmul (for layers too large for VMEM residency)
# --------------------------------------------------------------------------
def _linear_kernel(x_ref, w_ref, b_ref, o_ref, *, apply_relu):
    """(tm, tn) tile of y = act(x @ w + b); accumulates directly into the
    f32 output block (no separate scratch) across the K grid axis."""
    k = pl.program_id(2)

    @pl.when(k == 0)
    def _():
        o_ref[...] = jnp.zeros_like(o_ref)

    o_ref[...] += jnp.dot(
        x_ref[...], w_ref[...], preferred_element_type=jnp.float32)

    @pl.when(k == pl.num_programs(2) - 1)
    def _():
        out = o_ref[...] + b_ref[...]
        if apply_relu:
            out = jnp.maximum(out, 0.0)
        o_ref[...] = out


def _linear_padded(xp, wp, bp, *, apply_relu):
    Mp, Kp = xp.shape
    Kp2, Np = wp.shape
    assert Kp == Kp2, (Kp, Kp2)

    # 256-aligned tiles preferred (v6e/v7x MXU is 2x256x256); candidates all
    # divide the (8,128)-rounded extents so no extra padding is introduced.
    tm = _pick_tile(Mp, (256, 128, 64, 32, 16, 8))
    tn = _pick_tile(Np, (512, 256, 128))
    tk = _pick_tile(Kp, (512, 256, 128))

    # v7x megacore: keep at least 2 'parallel' tiles when the shape allows.
    if Mp // tm == 1 and Np // tn == 1 and tn > 128:
        tn //= 2

    grid = (Mp // tm, Np // tn, Kp // tk)

    return pl.pallas_call(
        functools.partial(_linear_kernel, apply_relu=apply_relu),
        out_shape=jax.ShapeDtypeStruct((Mp, Np), jnp.float32),
        grid_spec=pltpu.PrefetchScalarGridSpec(
            num_scalar_prefetch=0,
            grid=grid,
            in_specs=[
                pl.BlockSpec((tm, tk), lambda i, j, k: (i, k)),   # activations
                pl.BlockSpec((tk, tn), lambda i, j, k: (k, j)),   # weights
                pl.BlockSpec((1, tn), lambda i, j, k: (0, j)),    # bias row
            ],
            out_specs=pl.BlockSpec((tm, tn), lambda i, j, k: (i, j)),
        ),
        compiler_params=pltpu.CompilerParams(
            dimension_semantics=("parallel", "parallel", "arbitrary"),
            vmem_limit_bytes=_VMEM_LIMIT_BYTES,
        ),
    )(xp, wp, bp)


# --------------------------------------------------------------------------
# MLP forward
# --------------------------------------------------------------------------
@functools.partial(jax.jit, static_argnames=("out_dim",))
def mlp_forward(x, prepared, *, out_dim):
    """MLP forward with pre-prepared (padded/transposed) parameters."""
    M, K = x.shape
    Mp = _round_up(M, 8)
    K0p = prepared[0][0].shape[0]

    xp = x.astype(jnp.float32)
    if (Mp, K0p) != (M, K):
        xp = jnp.zeros((Mp, K0p), jnp.float32).at[:M, :K].set(xp)

    # Decide (at trace time, from shapes) whether the whole net fits VMEM.
    param_bytes = sum(w.size + b.size for w, b in prepared) * 4
    max_width = max([K0p] + [w.shape[1] for w, _ in prepared])
    tm_est = _pick_tile(Mp, (256, 128, 64, 32, 16, 8))
    act_bytes = 4 * tm_est * max_width * (len(prepared) + 1)
    fused_ok = (2 * param_bytes + 2 * act_bytes) <= 12 * 1024 * 1024

    if fused_ok:
        y = _mlp_fused(xp, prepared)
    else:
        n = len(prepared)
        y = xp
        for i, (wp, bp) in enumerate(prepared):
            y = _linear_padded(y, wp, bp, apply_relu=(i < n - 1))

    return y[:M, :out_dim]


# --------------------------------------------------------------------------
# Parameter init (mirrors MLP.__init__ defaults) and pure-JAX reference
# --------------------------------------------------------------------------
def init_mlp_params(key, layer_info, std=None):
    """Hidden layers: gain=2, zero bias; final layer: gain=1, zero bias
    (std=None path of the PyTorch module)."""
    params = []
    in_dim = layer_info[0]
    dims = layer_info[1:]
    n_layers = len(dims)
    keys = jax.random.split(key, n_layers)
    for i, (out_dim, k) in enumerate(zip(dims, keys)):
        is_last = i == n_layers - 1
        if std is not None:
            w = std * jax.random.normal(k, (out_dim, in_dim), jnp.float32)
            b = std * jax.random.normal(
                jax.random.fold_in(k, 1), (out_dim,), jnp.float32)
        else:
            gain = 1.0 if is_last else 2.0
            stdv = math.sqrt(gain / in_dim)
            w = stdv * jax.random.normal(k, (out_dim, in_dim), jnp.float32)
            b = jnp.zeros((out_dim,), jnp.float32)
        params.append((w, b))
        in_dim = out_dim
    return params


def mlp_reference(x, params):
    n = len(params)
    for i, (w, b) in enumerate(params):
        x = x @ w.T + b
        if i < n - 1:
            x = jnp.maximum(x, 0.0)
    return x


if __name__ == "__main__":
    key = jax.random.PRNGKey(0)
    k_x, k_p = jax.random.split(key)

    # Small MLP: layer_info = [in, hidden, hidden, out], batch of 8.
    layer_info = [32, 64, 64, 16]
    batch = 8

    x = jax.random.normal(k_x, (batch, layer_info[0]), dtype=jnp.float32)
    params = init_mlp_params(k_p, layer_info)

    # One-time parameter relayout (transpose + pad), hoisted out of forward.
    prepared = prepare_params(params)

    out = mlp_forward(x, prepared, out_dim=layer_info[-1])
    out = jax.block_until_ready(out)

    ref = mlp_reference(x, params)

    assert out.shape == (batch, layer_info[-1]), out.shape
    assert out.dtype == jnp.float32
    assert jnp.allclose(out, ref, rtol=1e-4, atol=1e-4), (
        float(jnp.max(jnp.abs(out - ref)))
    )

    print("KERNEL_OK")
</pallas_src>

<mosaic_0001>
module attributes {stable_mosaic.version = 11 : i64} {
  func.func @_fused_mlp_kernel(%arg0: i32, %arg1: memref<8x128xf32, #tpu.memory_space<vmem>>, %arg2: memref<128x128xf32, #tpu.memory_space<vmem>>, %arg3: memref<1x128xf32, #tpu.memory_space<vmem>>, %arg4: memref<128x128xf32, #tpu.memory_space<vmem>>, %arg5: memref<1x128xf32, #tpu.memory_space<vmem>>, %arg6: memref<128x128xf32, #tpu.memory_space<vmem>>, %arg7: memref<1x128xf32, #tpu.memory_space<vmem>>, %arg8: memref<8x128xf32, #tpu.memory_space<vmem>>) attributes {dimension_semantics = [#tpu.dimension_semantics<parallel>], iteration_bounds = array<i64: 1>, scalar_prefetch = 0 : i64, scratch_operands = 0 : i64, tpu.core_type = #tpu.core_type<tc>, window_params = [{transform_indices = @transform_0, window_bounds = array<i64: 8, 128>}, {pipeline_mode = #tpu.pipeline_mode<synchronous>, transform_indices = @transform_1, window_bounds = array<i64: 128, 128>}, {pipeline_mode = #tpu.pipeline_mode<synchronous>, transform_indices = @transform_2, window_bounds = array<i64: 1, 128>}, {pipeline_mode = #tpu.pipeline_mode<synchronous>, transform_indices = @transform_3, window_bounds = array<i64: 128, 128>}, {pipeline_mode = #tpu.pipeline_mode<synchronous>, transform_indices = @transform_4, window_bounds = array<i64: 1, 128>}, {pipeline_mode = #tpu.pipeline_mode<synchronous>, transform_indices = @transform_5, window_bounds = array<i64: 128, 128>}, {pipeline_mode = #tpu.pipeline_mode<synchronous>, transform_indices = @transform_6, window_bounds = array<i64: 1, 128>}, {transform_indices = @transform_7, window_bounds = array<i64: 8, 128>}]} {
    %c0 = arith.constant 0 : index
    %c0_0 = arith.constant 0 : index
    %0 = vector.load %arg1[%c0, %c0_0] : memref<8x128xf32, #tpu.memory_space<vmem>>, vector<8x128xf32>
    %c0_1 = arith.constant 0 : index
    %c0_2 = arith.constant 0 : index
    %1 = vector.load %arg2[%c0_1, %c0_2] : memref<128x128xf32, #tpu.memory_space<vmem>>, vector<128x128xf32>
    %c0_3 = arith.constant 0 : index
    %c0_4 = arith.constant 0 : index
    %2 = vector.load %arg3[%c0_3, %c0_4] : memref<1x128xf32, #tpu.memory_space<vmem>>, vector<1x128xf32>
    %cst = arith.constant dense<0.000000e+00> : vector<8x128xf32>
    %3 = tpu.matmul %0, %1, %cst {dimension_numbers = #tpu.dot_dimension_numbers<[1], [0], [0], [1], [0, 0, 1, 1], [], []>} : vector<8x128xf32>, vector<128x128xf32>, vector<8x128xf32> -> vector<8x128xf32>
    %4 = vector.broadcast %2 : vector<1x128xf32> to vector<8x128xf32>
    %5 = arith.addf %3, %4 : vector<8x128xf32>
    %cst_5 = arith.constant 0.000000e+00 : f32
    %6 = vector.broadcast %cst_5 : f32 to vector<8x128xf32>
    %7 = arith.maximumf %5, %6 : vector<8x128xf32>
    %c0_6 = arith.constant 0 : index
    %c0_7 = arith.constant 0 : index
    %8 = vector.load %arg4[%c0_6, %c0_7] : memref<128x128xf32, #tpu.memory_space<vmem>>, vector<128x128xf32>
    %c0_8 = arith.constant 0 : index
    %c0_9 = arith.constant 0 : index
    %9 = vector.load %arg5[%c0_8, %c0_9] : memref<1x128xf32, #tpu.memory_space<vmem>>, vector<1x128xf32>
    %cst_10 = arith.constant dense<0.000000e+00> : vector<8x128xf32>
    %10 = tpu.matmul %7, %8, %cst_10 {dimension_numbers = #tpu.dot_dimension_numbers<[1], [0], [0], [1], [0, 0, 1, 1], [], []>} : vector<8x128xf32>, vector<128x128xf32>, vector<8x128xf32> -> vector<8x128xf32>
    %11 = vector.broadcast %9 : vector<1x128xf32> to vector<8x128xf32>
    %12 = arith.addf %10, %11 : vector<8x128xf32>
    %cst_11 = arith.constant 0.000000e+00 : f32
    %13 = vector.broadcast %cst_11 : f32 to vector<8x128xf32>
    %14 = arith.maximumf %12, %13 : vector<8x128xf32>
    %c0_12 = arith.constant 0 : index
    %c0_13 = arith.constant 0 : index
    %15 = vector.load %arg6[%c0_12, %c0_13] : memref<128x128xf32, #tpu.memory_space<vmem>>, vector<128x128xf32>
    %c0_14 = arith.constant 0 : index
    %c0_15 = arith.constant 0 : index
    %16 = vector.load %arg7[%c0_14, %c0_15] : memref<1x128xf32, #tpu.memory_space<vmem>>, vector<1x128xf32>
    %cst_16 = arith.constant dense<0.000000e+00> : vector<8x128xf32>
    %17 = tpu.matmul %14, %15, %cst_16 {dimension_numbers = #tpu.dot_dimension_numbers<[1], [0], [0], [1], [0, 0, 1, 1], [], []>} : vector<8x128xf32>, vector<128x128xf32>, vector<8x128xf32> -> vector<8x128xf32>
    %18 = vector.broadcast %16 : vector<1x128xf32> to vector<8x128xf32>
    %19 = arith.addf %17, %18 : vector<8x128xf32>
    %c0_17 = arith.constant 0 : index
    %c0_18 = arith.constant 0 : index
    %20 = vector.load %arg8[%c0_17, %c0_18] : memref<8x128xf32, #tpu.memory_space<vmem>>, vector<8x128xf32>
    tpu.vector_store %arg8[%c0_17, %c0_18], %19 {strides = array<i32>} : memref<8x128xf32, #tpu.memory_space<vmem>>, vector<8x128xf32>,
    return
  }
  func.func @transform_0(%arg0: i32) -> (i32, i32) {
    %c0_i32 = arith.constant 0 : i32
    %c0_i32_0 = arith.constant 0 : i32
    return %arg0, %c0_i32 : i32, i32
  }
  func.func @transform_1(%arg0: i32) -> (i32, i32) {
    %c0_i32 = arith.constant 0 : i32
    %c0_i32_0 = arith.constant 0 : i32
    %c0_i32_1 = arith.constant 0 : i32
    return %c0_i32, %c0_i32_0 : i32, i32
  }
  func.func @transform_2(%arg0: i32) -> (i32, i32) {
    %c0_i32 = arith.constant 0 : i32
    %c0_i32_0 = arith.constant 0 : i32
    %c0_i32_1 = arith.constant 0 : i32
    return %c0_i32, %c0_i32_0 : i32, i32
  }
  func.func @transform_3(%arg0: i32) -> (i32, i32) {
    %c0_i32 = arith.constant 0 : i32
    %c0_i32_0 = arith.constant 0 : i32
    %c0_i32_1 = arith.constant 0 : i32
    return %c0_i32, %c0_i32_0 : i32, i32
  }
  func.func @transform_4(%arg0: i32) -> (i32, i32) {
    %c0_i32 = arith.constant 0 : i32
    %c0_i32_0 = arith.constant 0 : i32
    %c0_i32_1 = arith.constant 0 : i32
    return %c0_i32, %c0_i32_0 : i32, i32
  }
  func.func @transform_5(%arg0: i32) -> (i32, i32) {
    %c0_i32 = arith.constant 0 : i32
    %c0_i32_0 = arith.constant 0 : i32
    %c0_i32_1 = arith.constant 0 : i32
    return %c0_i32, %c0_i32_0 : i32, i32
  }
  func.func @transform_6(%arg0: i32) -> (i32, i32) {
    %c0_i32 = arith.constant 0 : i32
    %c0_i32_0 = arith.constant 0 : i32
    %c0_i32_1 = arith.constant 0 : i32
    return %c0_i32, %c0_i32_0 : i32, i32
  }
  func.func @transform_7(%arg0: i32) -> (i32, i32) {
    %c0_i32 = arith.constant 0 : i32
    %c0_i32_0 = arith.constant 0 : i32
    return %arg0, %c0_i32 : i32, i32
  }
}

</mosaic_0001>

<llo_original>
// kernel: mlp_forward.1
$region0: #{mlp_forward.1}
  #allocation0 [shape = 'u32[]', space=smem, size = 0x4, offset = 0x4, fixed_abs, tag = 'smem constant byte address 0x4 - core index']
  #allocation1 [shape = 'u32[72,128]{1,0:T(1,128)}', space=vmem, size = 0x9000, scoped, tag = 'internal scratch']
  %s0 = inlined_call_operand.vmem [shape: f32[8,128], index: 0, kind: input, shape index: {}]
  %s1 = inlined_call_operand.hbm [shape: f32[128,128], index: 1, kind: input, shape index: {}]
  %s2 = inlined_call_operand.vmem [shape: f32[1,128], index: 2, kind: input, shape index: {}]
  %s3 = inlined_call_operand.hbm [shape: f32[128,128], index: 3, kind: input, shape index: {}]
  %s4 = inlined_call_operand.vmem [shape: f32[1,128], index: 4, kind: input, shape index: {}]
  %s5 = inlined_call_operand.hbm [shape: f32[128,128], index: 5, kind: input, shape index: {}]
  %s6 = inlined_call_operand.vmem [shape: f32[1,128], index: 6, kind: input, shape index: {}]
  %s7 = inlined_call_operand.hbm [shape: f32[8,128], index: 7, kind: output, shape index: {}]
  %s8 = sld [smem:[#allocation0]]
  $region50: #{mlp_forward.1} parent=0
    _
  %s10 = ssub.s32 1, %s8
  %s11 = scalar_select 0, %s10, %s8
  $region1: #{mlp_forward.1} parent=0
    #allocation2 [shape = 'u8[65536]{0}', space=vmem, size = 0x10000, scoped, tag = 'input window, operand 1, single buffered']
    #allocation3 [shape = 's32[1]{0}', space=sflag, size = 0x4, scoped, tag = 'scoped memory for mlp_forward.1']
    #allocation4 [shape = 's32[1]{0}', space=sflag, size = 0x4, scoped, tag = 'scoped memory for mlp_forward.1']
    #allocation5 [shape = 'u8[65536]{0}', space=vmem, size = 0x10000, scoped, tag = 'input window, operand 3, single buffered']
    #allocation6 [shape = 's32[1]{0}', space=sflag, size = 0x4, scoped, tag = 'scoped memory for mlp_forward.1']
    #allocation7 [shape = 'u8[65536]{0}', space=vmem, size = 0x10000, scoped, tag = 'input window, operand 5, single buffered']
    #allocation8 [shape = 'u8[4096]{0}', space=vmem, size = 0x1000, scoped, tag = 'output window, operand 0, single buffered']
    %12 = vsyncpa [#allocation3], 0
    %13 = vsyncpa [#allocation6], 0
    %14 = vsyncpa [#allocation4], 0
    // Predicated region
    $region2: #{mlp_forward.1} parent=1 // pred_check
      _
    $region3: #{mlp_forward.1} parent=1 // pred_check_branch
      %16 = sbr.rel (0) target = $region5
    $region4: #{mlp_forward.1} parent=1 // pred_region
      _
    $region5: #{mlp_forward.1} parent=1 // pred_fallthru
      _
    // Predicated region
    $region6: #{mlp_forward.1} parent=1 // pred_check
      _
    $region7: #{mlp_forward.1} parent=1 // pred_check_branch
      %18 = sbr.rel (0) target = $region9
    $region8: #{mlp_forward.1} parent=1 // pred_region
      %20 = vsyncadd [#allocation3], 0
      %s21 = sshll.u32 %s1, 4
      %s22 = int_to_ptr.hbm [resolvable:$true] %s21
      %s23 = sshll.u32 [#allocation2], 4
      %s24 = int_to_ptr.vmem [resolvable:$true] %s23
      %29 = dma.hbm_to_vmem [thread:$0]  %s22, 2048, %s24, [#allocation3], 128, 128, 8
    $region9: #{mlp_forward.1} parent=1 // pred_fallthru
      _
    // Predicated region
    $region10: #{mlp_forward.1} parent=1 // pred_check
      _
    $region11: #{mlp_forward.1} parent=1 // pred_check_branch
      %31 = sbr.rel (0) target = $region13
    $region12: #{mlp_forward.1} parent=1 // pred_region
      _
    $region13: #{mlp_forward.1} parent=1 // pred_fallthru
      _
    // Predicated region
    $region14: #{mlp_forward.1} parent=1 // pred_check
      _
    $region15: #{mlp_forward.1} parent=1 // pred_check_branch
      %33 = sbr.rel (0) target = $region17
    $region16: #{mlp_forward.1} parent=1 // pred_region
      %35 = vsyncadd [#allocation6], 0
      %s36 = sshll.u32 %s3, 4
      %s37 = int_to_ptr.hbm [resolvable:$true] %s36
      %s38 = sshll.u32 [#allocation5], 4
      %s39 = int_to_ptr.vmem [resolvable:$true] %s38
      %44 = dma.hbm_to_vmem [thread:$0]  %s37, 2048, %s39, [#allocation6], 128, 128, 8
    $region17: #{mlp_forward.1} parent=1 // pred_fallthru
      _
    // Predicated region
    $region18: #{mlp_forward.1} parent=1 // pred_check
      _
    $region19: #{mlp_forward.1} parent=1 // pred_check_branch
      %46 = sbr.rel (0) target = $region21
    $region20: #{mlp_forward.1} parent=1 // pred_region
      _
    $region21: #{mlp_forward.1} parent=1 // pred_fallthru
      _
    // Predicated region
    $region22: #{mlp_forward.1} parent=1 // pred_check
      _
    $region23: #{mlp_forward.1} parent=1 // pred_check_branch
      %48 = sbr.rel (0) target = $region25
    $region24: #{mlp_forward.1} parent=1 // pred_region
      %50 = vsyncadd [#allocation6], 0
      %s51 = sshll.u32 %s5, 4
      %s52 = int_to_ptr.hbm [resolvable:$true] %s51
      %s53 = sshll.u32 [#allocation7], 4
      %s54 = int_to_ptr.vmem [resolvable:$true] %s53
      %59 = dma.hbm_to_vmem [thread:$0]  %s52, 2048, %s54, [#allocation6], 128, 128, 8
    $region25: #{mlp_forward.1} parent=1 // pred_fallthru
      _
    // Predicated region
    $region26: #{mlp_forward.1} parent=1 // pred_check
      _
    $region27: #{mlp_forward.1} parent=1 // pred_check_branch
      %61 = sbr.rel (0) target = $region29
    $region28: #{mlp_forward.1} parent=1 // pred_region
      _
    $region29: #{mlp_forward.1} parent=1 // pred_fallthru
      _
    // Predicated region
    $region30: #{mlp_forward.1} parent=1 // pred_check
      _
    $region31: #{mlp_forward.1} parent=1 // pred_check_branch
      %63 = sbr.rel (0) target = $region33
    $region32: #{mlp_forward.1} parent=1 // pred_region
      %65 = dma.done [#allocation3], 2048
    $region33: #{mlp_forward.1} parent=1 // pred_fallthru
      _
    // Predicated region
    $region34: #{mlp_forward.1} parent=1 // pred_check
      _
    $region35: #{mlp_forward.1} parent=1 // pred_check_branch
      %67 = sbr.rel (0) target = $region37
    $region36: #{mlp_forward.1} parent=1 // pred_region
      %69 = dma.done [#allocation6], 2048
    $region37: #{mlp_forward.1} parent=1 // pred_fallthru
      _
    // Predicated region
    $region38: #{mlp_forward.1} parent=1 // pred_check
      _
    $region39: #{mlp_forward.1} parent=1 // pred_check_branch
      %71 = sbr.rel (0) target = $region41
    $region40: #{mlp_forward.1} parent=1 // pred_region
      %73 = dma.done [#allocation6], 2048
    $region41: #{mlp_forward.1} parent=1 // pred_fallthru
      _
    %v74 = vld [vmem:[%s0] sm:$0xff]
    %v75 = vld [vmem:[#allocation2] sm:$0xff]
    %v76 = vld [vmem:[#allocation2 + $0x8] sm:$0xff]
    %v77 = vld [vmem:[#allocation2 + $0x10] sm:$0xff]
    %v78 = vld [vmem:[#allocation2 + $0x18] sm:$0xff]
    %v79 = vld [vmem:[#allocation2 + $0x20] sm:$0xff]
    %v80 = vld [vmem:[#allocation2 + $0x28] sm:$0xff]
    %v81 = vld [vmem:[#allocation2 + $0x30] sm:$0xff]
    %v82 = vld [vmem:[#allocation2 + $0x38] sm:$0xff]
    %v83 = vld [vmem:[#allocation2 + $0x40] sm:$0xff]
    %v84 = vld [vmem:[#allocation2 + $0x48] sm:$0xff]
    %v85 = vld [vmem:[#allocation2 + $0x50] sm:$0xff]
    %v86 = vld [vmem:[#allocation2 + $0x58] sm:$0xff]
    %v87 = vld [vmem:[#allocation2 + $0x60] sm:$0xff]
    %v88 = vld [vmem:[#allocation2 + $0x68] sm:$0xff]
    %v89 = vld [vmem:[#allocation2 + $0x70] sm:$0xff]
    %v90 = vld [vmem:[#allocation2 + $0x78] sm:$0xff]
    %v91 = vld [vmem:[%s2] sm:$0x1]
    %v93 = vperm.slane %v91, 0
    %95 = vmatpush.msra.mxu0 %v90
    %96 = vmatpush.msra.mxu0 %v89
    %97 = vmatpush.msra.mxu0 %v88
    %98 = vmatpush.msra.mxu0 %v87
    %99 = vmatpush.msra.mxu0 %v86
    %100 = vmatpush.msra.mxu0 %v85
    %101 = vmatpush.msra.mxu0 %v84
    %102 = vmatpush.msra.mxu0 %v83
    %103 = vmatpush.msra.mxu0 %v82
    %104 = vmatpush.msra.mxu0 %v81
    %105 = vmatpush.msra.mxu0 %v80
    %106 = vmatpush.msra.mxu0 %v79
    %107 = vmatpush.msra.mxu0 %v78
    %108 = vmatpush.msra.mxu0 %v77
    %109 = vmatpush.msra.mxu0 %v76
    %110 = vmatpush.msra.mxu0 %v75
    %111 = vmatmul.f32.gmra.mxu0 %v74
    %v112 = vpop.f32.mrf.mxu0
    %v113 = vadd.f32 %v93, %v112
    %114 = vdwg.mxu0
    %v115 = vmax.f32 %v113, 0.0
    %v116 = vld [vmem:[#allocation5] sm:$0xff]
    %v117 = vld [vmem:[#allocation5 + $0x8] sm:$0xff]
    %v118 = vld [vmem:[#allocation5 + $0x10] sm:$0xff]
    %v119 = vld [vmem:[#allocation5 + $0x18] sm:$0xff]
    %v120 = vld [vmem:[#allocation5 + $0x20] sm:$0xff]
    %v121 = vld [vmem:[#allocation5 + $0x28] sm:$0xff]
    %v122 = vld [vmem:[#allocation5 + $0x30] sm:$0xff]
    %v123 = vld [vmem:[#allocation5 + $0x38] sm:$0xff]
    %v124 = vld [vmem:[#allocation5 + $0x40] sm:$0xff]
    %v125 = vld [vmem:[#allocation5 + $0x48] sm:$0xff]
    %v126 = vld [vmem:[#allocation5 + $0x50] sm:$0xff]
    %v127 = vld [vmem:[#allocation5 + $0x58] sm:$0xff]
    %v128 = vld [vmem:[#allocation5 + $0x60] sm:$0xff]
    %v129 = vld [vmem:[#allocation5 + $0x68] sm:$0xff]
    %v130 = vld [vmem:[#allocation5 + $0x70] sm:$0xff]
    %v131 = vld [vmem:[#allocation5 + $0x78] sm:$0xff]
    %v132 = vld [vmem:[%s4] sm:$0x1]
    %v134 = vperm.slane %v132, 0
    %136 = vmatpush.msra.mxu0 %v131
    %137 = vmatpush.msra.mxu0 %v130
    %138 = vmatpush.msra.mxu0 %v129
    %139 = vmatpush.msra.mxu0 %v128
    %140 = vmatpush.msra.mxu0 %v127
    %141 = vmatpush.msra.mxu0 %v126
    %142 = vmatpush.msra.mxu0 %v125
    %143 = vmatpush.msra.mxu0 %v124
    %144 = vmatpush.msra.mxu0 %v123
    %145 = vmatpush.msra.mxu0 %v122
    %146 = vmatpush.msra.mxu0 %v121
    %147 = vmatpush.msra.mxu0 %v120
    %148 = vmatpush.msra.mxu0 %v119
    %149 = vmatpush.msra.mxu0 %v118
    %150 = vmatpush.msra.mxu0 %v117
    %151 = vmatpush.msra.mxu0 %v116
    %152 = vmatmul.f32.gmra.mxu0 %v115
    %v153 = vpop.f32.mrf.mxu0
    %v154 = vadd.f32 %v134, %v153
    %155 = vdwg.mxu0
    %v156 = vmax.f32 %v154, 0.0
    %v157 = vld [vmem:[#allocation7] sm:$0xff]
    %v158 = vld [vmem:[#allocation7 + $0x8] sm:$0xff]
    %v159 = vld [vmem:[#allocation7 + $0x10] sm:$0xff]
    %v160 = vld [vmem:[#allocation7 + $0x18] sm:$0xff]
    %v161 = vld [vmem:[#allocation7 + $0x20] sm:$0xff]
    %v162 = vld [vmem:[#allocation7 + $0x28] sm:$0xff]
    %v163 = vld [vmem:[#allocation7 + $0x30] sm:$0xff]
    %v164 = vld [vmem:[#allocation7 + $0x38] sm:$0xff]
    %v165 = vld [vmem:[#allocation7 + $0x40] sm:$0xff]
    %v166 = vld [vmem:[#allocation7 + $0x48] sm:$0xff]
    %v167 = vld [vmem:[#allocation7 + $0x50] sm:$0xff]
    %v168 = vld [vmem:[#allocation7 + $0x58] sm:$0xff]
    %v169 = vld [vmem:[#allocation7 + $0x60] sm:$0xff]
    %v170 = vld [vmem:[#allocation7 + $0x68] sm:$0xff]
    %v171 = vld [vmem:[#allocation7 + $0x70] sm:$0xff]
    %v172 = vld [vmem:[#allocation7 + $0x78] sm:$0xff]
    %v173 = vld [vmem:[%s6] sm:$0x1]
    %v175 = vperm.slane %v173, 0
    %177 = vmatpush.msra.mxu0 %v172
    %178 = vmatpush.msra.mxu0 %v171
    %179 = vmatpush.msra.mxu0 %v170
    %180 = vmatpush.msra.mxu0 %v169
    %181 = vmatpush.msra.mxu0 %v168
    %182 = vmatpush.msra.mxu0 %v167
    %183 = vmatpush.msra.mxu0 %v166
    %184 = vmatpush.msra.mxu0 %v165
    %185 = vmatpush.msra.mxu0 %v164
    %186 = vmatpush.msra.mxu0 %v163
    %187 = vmatpush.msra.mxu0 %v162
    %188 = vmatpush.msra.mxu0 %v161
    %189 = vmatpush.msra.mxu0 %v160
    %190 = vmatpush.msra.mxu0 %v159
    %191 = vmatpush.msra.mxu0 %v158
    %192 = vmatpush.msra.mxu0 %v157
    %193 = vmatmul.f32.gmra.mxu0 %v156
    %v194 = vpop.f32.mrf.mxu0
    %v195 = vadd.f32 %v175, %v194
    %196 = vdwg.mxu0
    %197 = vst [vmem:[#allocation8] sm:$0xff] %v195
    // Predicated region
    $region42: #{mlp_forward.1} parent=1 // pred_check
      _
    $region43: #{mlp_forward.1} parent=1 // pred_check_branch
      %199 = sbr.rel (0) target = $region45
    $region44: #{mlp_forward.1} parent=1 // pred_region
      %201 = vsyncadd [#allocation4], 0
      %s203 = sshll.u32 [#allocation8], 4
      %s204 = int_to_ptr.vmem [resolvable:$true] %s203
      %s205 = sshll.u32 %s7, 4
      %s206 = int_to_ptr.hbm [resolvable:$true] %s205
      %208 = dma.vmem_to_hbm [thread:$0]  %s204, 128, %s206, [#allocation4]
    $region45: #{mlp_forward.1} parent=1 // pred_fallthru
      _
    // Predicated region
    $region46: #{mlp_forward.1} parent=1 // pred_check
      _
    $region47: #{mlp_forward.1} parent=1 // pred_check_branch
      %210 = sbr.rel (0) target = $region49
    $region48: #{mlp_forward.1} parent=1 // pred_region
      %212 = dma.done [#allocation4], 128
    $region49: #{mlp_forward.1} parent=1 // pred_fallthru
      _
    %213 = vsyncpa [#allocation3], 1
    %214 = vsyncpa [#allocation6], 1
    %215 = vsyncpa [#allocation4], 1

</llo_original>
